<compile_context>
chip_gen: v5e
topology: v5e:2x2
jax: 0.10.0
libtpu: 0.0.40
codegen_flags: <defaults>
</compile_context>

<pallas_src>
import functools
import math

import jax
import jax.numpy as jnp
from jax.experimental import pallas as pl
from jax.experimental.pallas import tpu as pltpu


def _apply_activation(y, activation: str):
    if activation == "relu":
        return jnp.maximum(y, 0.0)
    elif activation == "sig":
        return jax.nn.sigmoid(y)
    elif activation == "tanh":
        return jnp.tanh(y)
    # torch module falls back to ReLU for unknown names
    return jnp.maximum(y, 0.0)


def _fused_mlp_kernel(x_ref, *refs, activation: str, num_layers: int):
    """Fused MLP: chains act(x @ W_k + b_k) for all layers in one kernel.

    refs = (w1, b1, w2, b2, ..., wN, bN, o_ref).  All intermediates stay in
    registers / VMEM; only the final activation is stored.
    """
    o_ref = refs[-1]
    x = x_ref[...].astype(jnp.float32)
    for k in range(num_layers):
        w = refs[2 * k][...]
        b = refs[2 * k + 1][...]          # (1, out) — broadcasts over batch
        y = jnp.dot(x, w, preferred_element_type=jnp.float32) + b
        x = _apply_activation(y, activation)
    o_ref[...] = x.astype(o_ref.dtype)


def dqn_forward(params, state, activation="relu", batch_tile=256):
    """Single fused pallas_call for the whole DQN forward pass.

    params: list of (w, b) with w: (in, out), b: (1, out)
    state : (B, layers[0]) float32
    """
    num_layers = len(params)
    B, in_dim = state.shape
    out_dim = params[-1][0].shape[1]

    # Pick a batch tile: multiple of 8 (sublane), capped at batch_tile.
    tb = min(batch_tile, max(8, ((B + 7) // 8) * 8))
    n_tiles = pl.cdiv(B, tb)
    b_pad = n_tiles * tb
    if b_pad != B:
        state = jnp.pad(state, ((0, b_pad - B), (0, 0)))

    kernel = functools.partial(
        _fused_mlp_kernel, activation=activation, num_layers=num_layers
    )

    # x streams per-tile; weights/biases are VMEM-resident (constant index_map).
    in_specs = [pl.BlockSpec((tb, in_dim), lambda i: (i, 0))]
    flat_wb = []
    for (w, b) in params:
        in_specs.append(pl.BlockSpec(w.shape, lambda i: (0, 0)))
        in_specs.append(pl.BlockSpec(b.shape, lambda i: (0, 0)))
        flat_wb.extend((w, b))

    out = pl.pallas_call(
        kernel,
        out_shape=jax.ShapeDtypeStruct((b_pad, out_dim), state.dtype),
        grid=(n_tiles,),
        in_specs=in_specs,
        out_specs=pl.BlockSpec((tb, out_dim), lambda i: (i, 0)),
        compiler_params=pltpu.CompilerParams(
            dimension_semantics=("parallel",)
        ),
    )(state, *flat_wb)

    return out[:B] if b_pad != B else out


def init_dqn_params(key, layers):
    """Xavier-uniform weights (torch default 'xunif'), zero biases."""
    params = []
    for k in range(len(layers) - 1):
        fan_in, fan_out = layers[k], layers[k + 1]
        key, sub = jax.random.split(key)
        bound = math.sqrt(6.0 / (fan_in + fan_out))
        w = jax.random.uniform(
            sub, (fan_in, fan_out), dtype=jnp.float32, minval=-bound, maxval=bound
        )
        b = jnp.zeros((1, fan_out), dtype=jnp.float32)
        params.append((w, b))
    return params


def dqn_forward_ref(params, state, activation="relu"):
    """Pure-JAX reference for correctness checking."""
    x = state
    for (w, b) in params:
        x = _apply_activation(x @ w + b, activation)
    return x


# TODO(synk): optimizer construction (Adam/SGD/Adagrad) in the torch module is
# training-time state, not part of the forward pass — not translated.

if __name__ == "__main__":
    # DQN(activation='relu', layers=[16, 32, 32, 4])
    layers = [16, 32, 32, 4]
    activation = "relu"

    key = jax.random.PRNGKey(0)
    key, pkey, xkey, xkey2 = jax.random.split(key, 4)
    params = init_dqn_params(pkey, layers)

    # Small-shape check (single tile, grid=(1,)).
    batch = 8
    state = jax.random.normal(xkey, (batch, layers[0]), dtype=jnp.float32)
    out = jax.block_until_ready(dqn_forward(params, state, activation=activation))
    ref = dqn_forward_ref(params, state, activation=activation)
    assert out.shape == (batch, layers[-1])
    assert jnp.allclose(out, ref, atol=1e-5, rtol=1e-5)

    # Larger batch exercises the batch-tiled grid path with resident weights.
    big_batch = 512
    state_big = jax.random.normal(xkey2, (big_batch, layers[0]), dtype=jnp.float32)
    out_big = jax.block_until_ready(
        dqn_forward(params, state_big, activation=activation)
    )
    ref_big = dqn_forward_ref(params, state_big, activation=activation)
    assert out_big.shape == (big_batch, layers[-1])
    assert jnp.allclose(out_big, ref_big, atol=1e-5, rtol=1e-5)

    print("KERNEL_OK")
</pallas_src>

<mosaic_0001>
module attributes {stable_mosaic.version = 11 : i64} {
  func.func @_fused_mlp_kernel(%arg0: i32, %arg1: memref<8x16xf32, #tpu.memory_space<vmem>>, %arg2: memref<16x32xf32, #tpu.memory_space<vmem>>, %arg3: memref<1x32xf32, #tpu.memory_space<vmem>>, %arg4: memref<32x32xf32, #tpu.memory_space<vmem>>, %arg5: memref<1x32xf32, #tpu.memory_space<vmem>>, %arg6: memref<32x4xf32, #tpu.memory_space<vmem>>, %arg7: memref<1x4xf32, #tpu.memory_space<vmem>>, %arg8: memref<8x4xf32, #tpu.memory_space<vmem>>) attributes {dimension_semantics = [#tpu.dimension_semantics<parallel>], iteration_bounds = array<i64: 1>, scalar_prefetch = 0 : i64, scratch_operands = 0 : i64, tpu.core_type = #tpu.core_type<tc>, window_params = [{transform_indices = @transform_0, window_bounds = array<i64: 8, 16>}, {pipeline_mode = #tpu.pipeline_mode<synchronous>, transform_indices = @transform_1, window_bounds = array<i64: 16, 32>}, {pipeline_mode = #tpu.pipeline_mode<synchronous>, transform_indices = @transform_2, window_bounds = array<i64: 1, 32>}, {pipeline_mode = #tpu.pipeline_mode<synchronous>, transform_indices = @transform_3, window_bounds = array<i64: 32, 32>}, {pipeline_mode = #tpu.pipeline_mode<synchronous>, transform_indices = @transform_4, window_bounds = array<i64: 1, 32>}, {pipeline_mode = #tpu.pipeline_mode<synchronous>, transform_indices = @transform_5, window_bounds = array<i64: 32, 4>}, {pipeline_mode = #tpu.pipeline_mode<synchronous>, transform_indices = @transform_6, window_bounds = array<i64: 1, 4>}, {transform_indices = @transform_7, window_bounds = array<i64: 8, 4>}]} {
    %c0 = arith.constant 0 : index
    %c0_0 = arith.constant 0 : index
    %0 = vector.load %arg1[%c0, %c0_0] : memref<8x16xf32, #tpu.memory_space<vmem>>, vector<8x16xf32>
    %c0_1 = arith.constant 0 : index
    %c0_2 = arith.constant 0 : index
    %1 = vector.load %arg2[%c0_1, %c0_2] : memref<16x32xf32, #tpu.memory_space<vmem>>, vector<16x32xf32>
    %c0_3 = arith.constant 0 : index
    %c0_4 = arith.constant 0 : index
    %2 = vector.load %arg3[%c0_3, %c0_4] : memref<1x32xf32, #tpu.memory_space<vmem>>, vector<1x32xf32>
    %cst = arith.constant dense<0.000000e+00> : vector<8x32xf32>
    %3 = tpu.matmul %0, %1, %cst {dimension_numbers = #tpu.dot_dimension_numbers<[1], [0], [0], [1], [0, 0, 1, 1], [], []>} : vector<8x16xf32>, vector<16x32xf32>, vector<8x32xf32> -> vector<8x32xf32>
    %4 = vector.broadcast %2 : vector<1x32xf32> to vector<8x32xf32>
    %5 = arith.addf %3, %4 : vector<8x32xf32>
    %cst_5 = arith.constant 0.000000e+00 : f32
    %6 = vector.broadcast %cst_5 : f32 to vector<8x32xf32>
    %7 = arith.maximumf %5, %6 : vector<8x32xf32>
    %c0_6 = arith.constant 0 : index
    %c0_7 = arith.constant 0 : index
    %8 = vector.load %arg4[%c0_6, %c0_7] : memref<32x32xf32, #tpu.memory_space<vmem>>, vector<32x32xf32>
    %c0_8 = arith.constant 0 : index
    %c0_9 = arith.constant 0 : index
    %9 = vector.load %arg5[%c0_8, %c0_9] : memref<1x32xf32, #tpu.memory_space<vmem>>, vector<1x32xf32>
    %cst_10 = arith.constant dense<0.000000e+00> : vector<8x32xf32>
    %10 = tpu.matmul %7, %8, %cst_10 {dimension_numbers = #tpu.dot_dimension_numbers<[1], [0], [0], [1], [0, 0, 1, 1], [], []>} : vector<8x32xf32>, vector<32x32xf32>, vector<8x32xf32> -> vector<8x32xf32>
    %11 = vector.broadcast %9 : vector<1x32xf32> to vector<8x32xf32>
    %12 = arith.addf %10, %11 : vector<8x32xf32>
    %cst_11 = arith.constant 0.000000e+00 : f32
    %13 = vector.broadcast %cst_11 : f32 to vector<8x32xf32>
    %14 = arith.maximumf %12, %13 : vector<8x32xf32>
    %c0_12 = arith.constant 0 : index
    %c0_13 = arith.constant 0 : index
    %15 = vector.load %arg6[%c0_12, %c0_13] : memref<32x4xf32, #tpu.memory_space<vmem>>, vector<32x4xf32>
    %c0_14 = arith.constant 0 : index
    %c0_15 = arith.constant 0 : index
    %16 = vector.load %arg7[%c0_14, %c0_15] : memref<1x4xf32, #tpu.memory_space<vmem>>, vector<1x4xf32>
    %cst_16 = arith.constant dense<0.000000e+00> : vector<8x4xf32>
    %17 = tpu.matmul %14, %15, %cst_16 {dimension_numbers = #tpu.dot_dimension_numbers<[1], [0], [0], [1], [0, 0, 1, 1], [], []>} : vector<8x32xf32>, vector<32x4xf32>, vector<8x4xf32> -> vector<8x4xf32>
    %18 = vector.broadcast %16 : vector<1x4xf32> to vector<8x4xf32>
    %19 = arith.addf %17, %18 : vector<8x4xf32>
    %cst_17 = arith.constant 0.000000e+00 : f32
    %20 = vector.broadcast %cst_17 : f32 to vector<8x4xf32>
    %21 = arith.maximumf %19, %20 : vector<8x4xf32>
    %c0_18 = arith.constant 0 : index
    %c0_19 = arith.constant 0 : index
    %22 = vector.load %arg8[%c0_18, %c0_19] : memref<8x4xf32, #tpu.memory_space<vmem>>, vector<8x4xf32>
    tpu.vector_store %arg8[%c0_18, %c0_19], %21 {strides = array<i32>} : memref<8x4xf32, #tpu.memory_space<vmem>>, vector<8x4xf32>,
    return
  }
  func.func @transform_0(%arg0: i32) -> (i32, i32) {
    %c0_i32 = arith.constant 0 : i32
    %c0_i32_0 = arith.constant 0 : i32
    return %arg0, %c0_i32 : i32, i32
  }
  func.func @transform_1(%arg0: i32) -> (i32, i32) {
    %c0_i32 = arith.constant 0 : i32
    %c0_i32_0 = arith.constant 0 : i32
    %c0_i32_1 = arith.constant 0 : i32
    return %c0_i32, %c0_i32_0 : i32, i32
  }
  func.func @transform_2(%arg0: i32) -> (i32, i32) {
    %c0_i32 = arith.constant 0 : i32
    %c0_i32_0 = arith.constant 0 : i32
    %c0_i32_1 = arith.constant 0 : i32
    return %c0_i32, %c0_i32_0 : i32, i32
  }
  func.func @transform_3(%arg0: i32) -> (i32, i32) {
    %c0_i32 = arith.constant 0 : i32
    %c0_i32_0 = arith.constant 0 : i32
    %c0_i32_1 = arith.constant 0 : i32
    return %c0_i32, %c0_i32_0 : i32, i32
  }
  func.func @transform_4(%arg0: i32) -> (i32, i32) {
    %c0_i32 = arith.constant 0 : i32
    %c0_i32_0 = arith.constant 0 : i32
    %c0_i32_1 = arith.constant 0 : i32
    return %c0_i32, %c0_i32_0 : i32, i32
  }
  func.func @transform_5(%arg0: i32) -> (i32, i32) {
    %c0_i32 = arith.constant 0 : i32
    %c0_i32_0 = arith.constant 0 : i32
    %c0_i32_1 = arith.constant 0 : i32
    return %c0_i32, %c0_i32_0 : i32, i32
  }
  func.func @transform_6(%arg0: i32) -> (i32, i32) {
    %c0_i32 = arith.constant 0 : i32
    %c0_i32_0 = arith.constant 0 : i32
    %c0_i32_1 = arith.constant 0 : i32
    return %c0_i32, %c0_i32_0 : i32, i32
  }
  func.func @transform_7(%arg0: i32) -> (i32, i32) {
    %c0_i32 = arith.constant 0 : i32
    %c0_i32_0 = arith.constant 0 : i32
    return %arg0, %c0_i32 : i32, i32
  }
}

</mosaic_0001>

<llo_original>
// kernel: tpu_custom_call.1
$region0: #{tpu_custom_call.1}
  #allocation0 [shape = 'u32[]', space=smem, size = 0x4, offset = 0x4, fixed_abs, tag = 'smem constant byte address 0x4 - core index']
  #allocation1 [shape = 'u32[72,128]{1,0:T(1,128)}', space=vmem, size = 0x9000, scoped, tag = 'internal scratch']
  %s0 = inlined_call_operand.hbm [shape: f32[8,16], index: 0, kind: input, shape index: {}]
  %s1 = inlined_call_operand.hbm [shape: f32[16,32], index: 1, kind: input, shape index: {}]
  %s2 = inlined_call_operand.vmem [shape: f32[1,32], index: 2, kind: input, shape index: {}]
  %s3 = inlined_call_operand.vmem [shape: f32[32,32], index: 3, kind: input, shape index: {}]
  %s4 = inlined_call_operand.vmem [shape: f32[1,32], index: 4, kind: input, shape index: {}]
  %s5 = inlined_call_operand.vmem [shape: f32[32,4], index: 5, kind: input, shape index: {}]
  %s6 = inlined_call_operand.vmem [shape: f32[1,4], index: 6, kind: input, shape index: {}]
  %s7 = inlined_call_operand.vmem [shape: f32[8,4], index: 7, kind: output, shape index: {}]
  %s8 = sld [smem:[#allocation0]]
  $region46: #{tpu_custom_call.1} parent=0
    _
  %s10 = ssub.s32 1, %s8
  %s11 = scalar_select 0, %s10, %s8
  $region1: #{tpu_custom_call.1} parent=0
    #allocation2 [shape = 'u8[4096]{0}', space=vmem, size = 0x1000, scoped, tag = 'input window, operand 0, single buffered']
    #allocation3 [shape = 's32[1]{0}', space=sflag, size = 0x4, scoped, tag = 'scoped memory for tpu_custom_call.1']
    #allocation4 [shape = 'u8[8192]{0}', space=vmem, size = 0x2000, scoped, tag = 'input window, operand 1, single buffered']
    #allocation5 [shape = 's32[1]{0}', space=sflag, size = 0x4, scoped, tag = 'scoped memory for tpu_custom_call.1']
    %12 = vsyncpa [#allocation3], 0
    %13 = vsyncpa [#allocation5], 0
    // Predicated region
    $region2: #{tpu_custom_call.1} parent=1 // pred_check
      _
    $region3: #{tpu_custom_call.1} parent=1 // pred_check_branch
      %15 = sbr.rel (0) target = $region5
    $region4: #{tpu_custom_call.1} parent=1 // pred_region
      %17 = vsyncadd [#allocation3], 0
      %s19 = sshll.u32 %s0, 4
      %s20 = int_to_ptr.hbm [resolvable:$true] %s19
      %s21 = sshll.u32 [#allocation2], 4
      %s22 = int_to_ptr.vmem [resolvable:$true] %s21
      %24 = dma.hbm_to_vmem [thread:$0]  %s20, 128, %s22, [#allocation3]
    $region5: #{tpu_custom_call.1} parent=1 // pred_fallthru
      _
    // Predicated region
    $region6: #{tpu_custom_call.1} parent=1 // pred_check
      _
    $region7: #{tpu_custom_call.1} parent=1 // pred_check_branch
      %26 = sbr.rel (0) target = $region9
    $region8: #{tpu_custom_call.1} parent=1 // pred_region
      %28 = vsyncadd [#allocation5], 0
      %s29 = sshll.u32 %s1, 4
      %s30 = int_to_ptr.hbm [resolvable:$true] %s29
      %s31 = sshll.u32 [#allocation4], 4
      %s32 = int_to_ptr.vmem [resolvable:$true] %s31
      %37 = dma.hbm_to_vmem [thread:$0]  %s30, 256, %s32, [#allocation5], 128, 128, 8
    $region9: #{tpu_custom_call.1} parent=1 // pred_fallthru
      _
    // Predicated region
    $region10: #{tpu_custom_call.1} parent=1 // pred_check
      _
    $region11: #{tpu_custom_call.1} parent=1 // pred_check_branch
      %39 = sbr.rel (0) target = $region13
    $region12: #{tpu_custom_call.1} parent=1 // pred_region
      _
    $region13: #{tpu_custom_call.1} parent=1 // pred_fallthru
      _
    // Predicated region
    $region14: #{tpu_custom_call.1} parent=1 // pred_check
      _
    $region15: #{tpu_custom_call.1} parent=1 // pred_check_branch
      %41 = sbr.rel (0) target = $region17
    $region16: #{tpu_custom_call.1} parent=1 // pred_region
      _
    $region17: #{tpu_custom_call.1} parent=1 // pred_fallthru
      _
    // Predicated region
    $region18: #{tpu_custom_call.1} parent=1 // pred_check
      _
    $region19: #{tpu_custom_call.1} parent=1 // pred_check_branch
      %43 = sbr.rel (0) target = $region21
    $region20: #{tpu_custom_call.1} parent=1 // pred_region
      _
    $region21: #{tpu_custom_call.1} parent=1 // pred_fallthru
      _
    // Predicated region
    $region22: #{tpu_custom_call.1} parent=1 // pred_check
      _
    $region23: #{tpu_custom_call.1} parent=1 // pred_check_branch
      %45 = sbr.rel (0) target = $region25
    $region24: #{tpu_custom_call.1} parent=1 // pred_region
      _
    $region25: #{tpu_custom_call.1} parent=1 // pred_fallthru
      _
    // Predicated region
    $region26: #{tpu_custom_call.1} parent=1 // pred_check
      _
    $region27: #{tpu_custom_call.1} parent=1 // pred_check_branch
      %47 = sbr.rel (0) target = $region29
    $region28: #{tpu_custom_call.1} parent=1 // pred_region
      _
    $region29: #{tpu_custom_call.1} parent=1 // pred_fallthru
      _
    // Predicated region
    $region30: #{tpu_custom_call.1} parent=1 // pred_check
      _
    $region31: #{tpu_custom_call.1} parent=1 // pred_check_branch
      %49 = sbr.rel (0) target = $region33
    $region32: #{tpu_custom_call.1} parent=1 // pred_region
      %51 = dma.done [#allocation3], 128
    $region33: #{tpu_custom_call.1} parent=1 // pred_fallthru
      _
    // Predicated region
    $region34: #{tpu_custom_call.1} parent=1 // pred_check
      _
    $region35: #{tpu_custom_call.1} parent=1 // pred_check_branch
      %53 = sbr.rel (0) target = $region37
    $region36: #{tpu_custom_call.1} parent=1 // pred_region
      %55 = dma.done [#allocation5], 256
    $region37: #{tpu_custom_call.1} parent=1 // pred_fallthru
      _
    %v56 = vld [vmem:[#allocation2] sm:$0xff]
    %v57 = vld [vmem:[#allocation4] sm:$0xff]
    %v58 = vld [vmem:[#allocation4 + $0x8] sm:$0xff]
    %v59 = vld [vmem:[%s2] sm:$0x1]
    %v61 = vperm.slane %v59, 0
    %vm63 = vcmask 130048
    %v65 = vsel %vm63, %v56, 0
    %67 = vmatpush.msra.mxu0 0.0
    %68 = vmatpush.msra.mxu0 0.0
    %69 = vmatpush.msra.mxu0 0.0
    %70 = vmatpush.msra.mxu0 0.0
    %71 = vmatpush.msra.mxu0 0.0
    %72 = vmatpush.msra.mxu0 0.0
    %73 = vmatpush.msra.mxu0 0.0
    %74 = vmatpush.msra.mxu0 0.0
    %75 = vmatpush.msra.mxu0 0.0
    %76 = vmatpush.msra.mxu0 0.0
    %77 = vmatpush.msra.mxu0 0.0
    %78 = vmatpush.msra.mxu0 0.0
    %79 = vmatpush.msra.mxu0 0.0
    %80 = vmatpush.msra.mxu0 0.0
    %81 = vmatpush.msra.mxu0 %v58
    %82 = vmatpush.msra.mxu0 %v57
    %83 = vmatmul.f32.gmra.mxu0 %v65
    %v84 = vpop.f32.mrf.mxu0
    %v85 = vadd.f32 %v61, %v84
    %86 = vdwg.mxu0
    %v87 = vmax.f32 %v85, 0.0
    %v88 = vld [vmem:[%s3] sm:$0xff]
    %v89 = vld [vmem:[%s3 + $0x8] sm:$0xff]
    %v90 = vld [vmem:[%s3 + $0x10] sm:$0xff]
    %v91 = vld [vmem:[%s3 + $0x18] sm:$0xff]
    %v92 = vld [vmem:[%s4] sm:$0x1]
    %v94 = vperm.slane %v92, 0
    %vm96 = vcmask 261120
    %v98 = vsel %vm96, %v87, 0
    %100 = vmatpush.msra.mxu0 0.0
    %101 = vmatpush.msra.mxu0 0.0
    %102 = vmatpush.msra.mxu0 0.0
    %103 = vmatpush.msra.mxu0 0.0
    %104 = vmatpush.msra.mxu0 0.0
    %105 = vmatpush.msra.mxu0 0.0
    %106 = vmatpush.msra.mxu0 0.0
    %107 = vmatpush.msra.mxu0 0.0
    %108 = vmatpush.msra.mxu0 0.0
    %109 = vmatpush.msra.mxu0 0.0
    %110 = vmatpush.msra.mxu0 0.0
    %111 = vmatpush.msra.mxu0 0.0
    %112 = vmatpush.msra.mxu0 %v91
    %113 = vmatpush.msra.mxu0 %v90
    %114 = vmatpush.msra.mxu0 %v89
    %115 = vmatpush.msra.mxu0 %v88
    %116 = vmatmul.f32.gmra.mxu0 %v98
    %v117 = vpop.f32.mrf.mxu0
    %v118 = vadd.f32 %v94, %v117
    %119 = vdwg.mxu0
    %v120 = vmax.f32 %v118, 0.0
    %v121 = vld [vmem:[%s5] sm:$0xff]
    %v122 = vld [vmem:[%s5 + $0x8] sm:$0xff]
    %v123 = vld [vmem:[%s5 + $0x10] sm:$0xff]
    %v124 = vld [vmem:[%s5 + $0x18] sm:$0xff]
    %v125 = vld [vmem:[%s6] sm:$0x1]
    %v127 = vperm.slane %v125, 0
    %v130 = vsel %vm96, %v120, 0
    %132 = vmatpush.msra.mxu0 0.0
    %133 = vmatpush.msra.mxu0 0.0
    %134 = vmatpush.msra.mxu0 0.0
    %135 = vmatpush.msra.mxu0 0.0
    %136 = vmatpush.msra.mxu0 0.0
    %137 = vmatpush.msra.mxu0 0.0
    %138 = vmatpush.msra.mxu0 0.0
    %139 = vmatpush.msra.mxu0 0.0
    %140 = vmatpush.msra.mxu0 0.0
    %141 = vmatpush.msra.mxu0 0.0
    %142 = vmatpush.msra.mxu0 0.0
    %143 = vmatpush.msra.mxu0 0.0
    %144 = vmatpush.msra.mxu0 %v124
    %145 = vmatpush.msra.mxu0 %v123
    %146 = vmatpush.msra.mxu0 %v122
    %147 = vmatpush.msra.mxu0 %v121
    %148 = vmatmul.f32.gmra.mxu0 %v130
    %v149 = vpop.f32.mrf.mxu0
    %v150 = vadd.f32 %v127, %v149
    %151 = vdwg.mxu0
    %v152 = vmax.f32 %v150, 0.0
    %vm153 = vcmask 31744
    %154 = vst.msk [vmem:[%s7] sm:$0xff] %vm153, %v152
    // Predicated region
    $region38: #{tpu_custom_call.1} parent=1 // pred_check
      _
    $region39: #{tpu_custom_call.1} parent=1 // pred_check_branch
      %156 = sbr.rel (0) target = $region41
    $region40: #{tpu_custom_call.1} parent=1 // pred_region
      _
    $region41: #{tpu_custom_call.1} parent=1 // pred_fallthru
      _
    // Predicated region
    $region42: #{tpu_custom_call.1} parent=1 // pred_check
      _
    $region43: #{tpu_custom_call.1} parent=1 // pred_check_branch
      %158 = sbr.rel (0) target = $region45
    $region44: #{tpu_custom_call.1} parent=1 // pred_region
      _
    $region45: #{tpu_custom_call.1} parent=1 // pred_fallthru
      _
    %159 = vsyncpa [#allocation3], 1
    %160 = vsyncpa [#allocation5], 1

</llo_original>
